<compile_context>
chip_gen: v7x
topology: tpu7x:2x2x1
jax: 0.10.0
libtpu: 0.0.40
codegen_flags: <defaults>
</compile_context>

<pallas_src>
import functools

import jax
import jax.numpy as jnp
import numpy as np
from jax import lax
from jax.experimental import pallas as pl
from jax.experimental.pallas import tpu as pltpu


def _round_up(x, m):
    return (x + m - 1) // m * m


def _vmem_capacity_bytes():
    """Per-core VMEM capacity; falls back to the smallest real value (v7x's 64 MiB)."""
    try:
        return int(pltpu.get_tpu_info().vmem_capacity_bytes)
    except Exception:
        return 64 << 20


def _encoding_kernel(ids_ref, emb_ref, pos_ref, out_ref, *,
                     block_tokens, vocab_size, feat, unroll):
    """One grid step produces a dense (block_tokens, D) output tile.

    ids_ref : [B*SP]            int32 in SMEM (scalar prefetch) -- flattened token ids.
    emb_ref : [V, D]            VMEM-resident embedding table (constant index -> DMA'd once).
    pos_ref : [block_tokens, D] positional-encoding tile for this block's positions.
    out_ref : [block_tokens, D] output tile.
    """
    base = pl.program_id(0) * block_tokens
    # Sublane-index grid used to place each broadcast row into its slot of the
    # (8, D) group.  Hoisted out of the loop (JAX does not CSE broadcasts).
    sub_iota = lax.broadcasted_iota(jnp.int32, (8, feat), 0)

    def body(g, carry):
        g_off = pl.multiple_of(g * 8, 8)            # aligned group offset -> unmasked store
        group = jnp.zeros((8, feat), jnp.float32)
        for r in range(8):                          # one sublane group of tokens
            tok_id = ids_ref[base + g_off + r]      # scalar read from SMEM
            tok_id = jnp.clip(tok_id, 0, vocab_size - 1)   # VMEM gather has no bounds check
            row = emb_ref[pl.ds(tok_id, 1), :]      # (1, D) gather from resident table
            row_b = jnp.broadcast_to(row, (8, feat)).astype(jnp.float32)
            group = jnp.where(sub_iota == r, row_b, group)
        pos_grp = pos_ref[pl.ds(g_off, 8), :].astype(jnp.float32)
        out_ref[pl.ds(g_off, 8), :] = (group + pos_grp).astype(out_ref.dtype)
        return carry

    lax.fori_loop(0, block_tokens // 8, body, 0, unroll=unroll)


def encoding_forward(ids, emb_table, pos_table, *, block_tokens=1024, out_dtype=None):
    """out[b, s, :] = emb_table[ids[b, s]] + pos_table[s]   (PyTorch Encoding.forward).

    block_tokens : target tokens per grid step (~1024 for v6e/v7x, ~512 for v5e).
    out_dtype    : output dtype; defaults to promote(emb, pos).  Pass jnp.bfloat16
                   when downstream allows, to halve the dominant HBM writeback.
    """
    B, S = ids.shape
    V, D = emb_table.shape
    max_len, d_pos = pos_table.shape
    assert D == d_pos, "embedding / positional feature dims must match"
    assert S <= max_len, "sequence length exceeds positional-encoding table"

    # ---- pick token-block size TS (multiple of 8) and padded seq length SP with TS | SP,
    #      so every block lies inside a single sequence and the pos tile index is block % bps.
    sp0 = _round_up(S, 8)
    ts_cap = min(_round_up(block_tokens, 8), sp0)
    ts = ts_cap
    while sp0 % ts != 0:
        ts -= 8
    if ts < min(128, ts_cap):          # degenerate divisor -> pad the sequence instead
        ts = ts_cap
    sp = _round_up(sp0, ts)
    blocks_per_seq = sp // ts
    n_blocks = B * blocks_per_seq      # independent blocks; shards across both TCs on v7x

    # ---- pad & flatten inputs (padded slots gather row 0 / zero pos, sliced off at the end).
    ids_p = ids.astype(jnp.int32)
    pos_slab = pos_table[:S]
    if sp != S:
        ids_p = jnp.pad(ids_p, ((0, 0), (0, sp - S)))
        pos_slab = jnp.pad(pos_slab, ((0, sp - S), (0, 0)))
    flat_ids = ids_p.reshape(-1)       # [B*SP], scalar-prefetched into SMEM
    # TODO(synk): for very long contexts (B*SP >~ 64K tokens) switch flat_ids from whole-array
    # scalar prefetch to per-block SMEM BlockSpec tiles to bound SMEM usage.

    if out_dtype is None:
        out_dtype = jnp.promote_types(emb_table.dtype, pos_table.dtype)
    out_itemsize = jnp.dtype(out_dtype).itemsize

    groups = ts // 8
    unroll = max(1, min(2 if D <= 1024 else 1, groups))   # keep (8, D) group vreg pressure low

    kernel = functools.partial(
        _encoding_kernel, block_tokens=ts, vocab_size=V, feat=D, unroll=unroll)

    grid_spec = pltpu.PrefetchScalarGridSpec(
        num_scalar_prefetch=1,
        grid=(n_blocks,),
        in_specs=[
            # Whole embedding table resident in VMEM (constant block index -> DMA'd once).
            # TODO(synk): when 2*V*D*itemsize exceeds the per-core VMEM budget (realistic
            # vocabs on v7x's 64 MiB), switch this input to memory_space=pl.ANY with a
            # manually pipelined make_async_copy row-gather, and single-buffer the resident
            # table (pipeline_mode=pl.Buffered(1)) once verified supported, to halve its cost.
            pl.BlockSpec((V, D), lambda i, ids_s: (0, 0)),
            # Positional tile for this block's positions (hoists the per-token pos lookup).
            pl.BlockSpec((ts, D), lambda i, ids_s: (i % blocks_per_seq, 0)),
        ],
        out_specs=pl.BlockSpec((ts, D), lambda i, ids_s: (i, 0)),
    )

    emb_bytes = V * D * jnp.dtype(emb_table.dtype).itemsize
    pos_tile_bytes = ts * D * jnp.dtype(pos_table.dtype).itemsize
    out_tile_bytes = ts * D * out_itemsize
    # Everything double-buffered by default, + headroom for semaphores / internal scratch.
    need = 2 * emb_bytes + 2 * pos_tile_bytes + 2 * out_tile_bytes + (2 << 20)
    cap = _vmem_capacity_bytes() - (4 << 20)       # per-core physical VMEM minus headroom
    vmem_limit = int(max(min(max(need, 32 << 20), cap), 1 << 20))

    cost = pl.CostEstimate(
        flops=B * sp * D,                          # one add per output element
        transcendentals=0,
        bytes_accessed=int(emb_bytes + B * sp * (D * jnp.dtype(pos_table.dtype).itemsize
                                                 + D * out_itemsize + 4)),
    )

    out_flat = pl.pallas_call(
        kernel,
        out_shape=jax.ShapeDtypeStruct((B * sp, D), out_dtype),
        grid_spec=grid_spec,
        compiler_params=pltpu.CompilerParams(
            dimension_semantics=("parallel",),     # token blocks are independent
            vmem_limit_bytes=vmem_limit,
        ),
        cost_estimate=cost,
    )(flat_ids, emb_table, pos_slab)

    return out_flat.reshape(B, sp, D)[:, :S, :]


if __name__ == "__main__":
    # Small, deterministic shapes consistent with the module's forward:
    # x: [B, S] int token ids -> output [B, S, D]
    B, S, D, V, MAX_LEN = 2, 8, 128, 64, 32

    key = jax.random.PRNGKey(0)
    k_ids, k_emb = jax.random.split(key)

    ids = jax.random.randint(k_ids, (B, S), 0, V, dtype=jnp.int32)

    # Deterministic "parameters": learned-style embedding table (random normal from a
    # fixed key) + sinusoidal positional-encoding table (pure function).
    emb_table = jax.random.normal(k_emb, (V, D), dtype=jnp.float32)
    pos = jnp.arange(MAX_LEN, dtype=jnp.float32)[:, None]
    dim = jnp.arange(D // 2, dtype=jnp.float32)[None, :]
    angle = pos / jnp.power(10000.0, 2.0 * dim / D)
    pos_table = jnp.concatenate([jnp.sin(angle), jnp.cos(angle)], axis=-1).astype(jnp.float32)

    # block_tokens=8 -> two grid steps at this tiny size (exercises the blocked path +
    # per-block positional tiling).  Real sizes use the 1024-token default.
    out = encoding_forward(ids, emb_table, pos_table, block_tokens=8)
    out = jax.block_until_ready(out)

    # Pure-JAX reference for the same semantics.
    ref = emb_table[ids] + pos_table[jnp.arange(S)][None, :, :]
    assert out.shape == (B, S, D)
    assert np.allclose(np.asarray(out), np.asarray(ref), atol=1e-6)

    print("KERNEL_OK")
</pallas_src>

<mosaic_0001>
module attributes {stable_mosaic.version = 11 : i64} {
  func.func @_encoding_kernel(%arg0: i32, %arg1: memref<16xi32, #tpu.memory_space<smem>>, %arg2: memref<64x128xf32, #tpu.memory_space<vmem>>, %arg3: memref<8x128xf32, #tpu.memory_space<vmem>>, %arg4: memref<8x128xf32, #tpu.memory_space<vmem>>) attributes {dimension_semantics = [#tpu.dimension_semantics<parallel>], iteration_bounds = array<i64: 2>, scalar_prefetch = 1 : i64, scratch_operands = 0 : i64, tpu.core_type = #tpu.core_type<tc>, window_params = [{pipeline_mode = #tpu.pipeline_mode<synchronous>, transform_indices = @transform_0, window_bounds = array<i64: 64, 128>}, {transform_indices = @transform_1, window_bounds = array<i64: 8, 128>}, {transform_indices = @transform_2, window_bounds = array<i64: 8, 128>}]} {
    %c8_i32 = arith.constant 8 : i32
    %0 = arith.muli %arg0, %c8_i32 : i32
    %1 = tpu.iota {dimensions = array<i32: 0>} : vector<8x128xi32>
    %c0_i32 = arith.constant 0 : i32
    %c8_i32_0 = arith.constant 8 : i32
    %2 = arith.muli %c0_i32, %c8_i32_0 : i32
    %3 = tpu.assume_multiple %2, 8 : i32
    %cst = arith.constant 0.000000e+00 : f32
    %4 = vector.broadcast %cst : f32 to vector<8x128xf32>
    %5 = arith.addi %0, %3 : i32
    %c0_i32_1 = arith.constant 0 : i32
    %6 = arith.addi %5, %c0_i32_1 : i32
    %7 = arith.index_cast %6 : i32 to index
    %8 = memref.load %arg1[%7] : memref<16xi32, #tpu.memory_space<smem>>
    %c0_i32_2 = arith.constant 0 : i32
    %c63_i32 = arith.constant 63 : i32
    %9 = arith.maxsi %c0_i32_2, %8 : i32
    %10 = arith.minsi %c63_i32, %9 : i32
    %11 = arith.index_cast %10 : i32 to index
    %c0 = arith.constant 0 : index
    %12 = vector.load %arg2[%11, %c0] : memref<64x128xf32, #tpu.memory_space<vmem>>, vector<1x128xf32>
    %13 = vector.shape_cast %12 : vector<1x128xf32> to vector<1x128xf32>
    %14 = vector.broadcast %13 : vector<1x128xf32> to vector<8x128xf32>
    %c0_i32_3 = arith.constant 0 : i32
    %15 = vector.broadcast %c0_i32_3 : i32 to vector<8x128xi32>
    %16 = arith.cmpi eq, %1, %15 : vector<8x128xi32>
    %17 = arith.select %16, %14, %4 : vector<8x128xi1>, vector<8x128xf32>
    %18 = arith.addi %0, %3 : i32
    %c1_i32 = arith.constant 1 : i32
    %19 = arith.addi %18, %c1_i32 : i32
    %20 = arith.index_cast %19 : i32 to index
    %21 = memref.load %arg1[%20] : memref<16xi32, #tpu.memory_space<smem>>
    %c0_i32_4 = arith.constant 0 : i32
    %c63_i32_5 = arith.constant 63 : i32
    %22 = arith.maxsi %c0_i32_4, %21 : i32
    %23 = arith.minsi %c63_i32_5, %22 : i32
    %24 = arith.index_cast %23 : i32 to index
    %c0_6 = arith.constant 0 : index
    %25 = vector.load %arg2[%24, %c0_6] : memref<64x128xf32, #tpu.memory_space<vmem>>, vector<1x128xf32>
    %26 = vector.shape_cast %25 : vector<1x128xf32> to vector<1x128xf32>
    %27 = vector.broadcast %26 : vector<1x128xf32> to vector<8x128xf32>
    %c1_i32_7 = arith.constant 1 : i32
    %28 = vector.broadcast %c1_i32_7 : i32 to vector<8x128xi32>
    %29 = arith.cmpi eq, %1, %28 : vector<8x128xi32>
    %30 = arith.select %29, %27, %17 : vector<8x128xi1>, vector<8x128xf32>
    %31 = arith.addi %0, %3 : i32
    %c2_i32 = arith.constant 2 : i32
    %32 = arith.addi %31, %c2_i32 : i32
    %33 = arith.index_cast %32 : i32 to index
    %34 = memref.load %arg1[%33] : memref<16xi32, #tpu.memory_space<smem>>
    %c0_i32_8 = arith.constant 0 : i32
    %c63_i32_9 = arith.constant 63 : i32
    %35 = arith.maxsi %c0_i32_8, %34 : i32
    %36 = arith.minsi %c63_i32_9, %35 : i32
    %37 = arith.index_cast %36 : i32 to index
    %c0_10 = arith.constant 0 : index
    %38 = vector.load %arg2[%37, %c0_10] : memref<64x128xf32, #tpu.memory_space<vmem>>, vector<1x128xf32>
    %39 = vector.shape_cast %38 : vector<1x128xf32> to vector<1x128xf32>
    %40 = vector.broadcast %39 : vector<1x128xf32> to vector<8x128xf32>
    %c2_i32_11 = arith.constant 2 : i32
    %41 = vector.broadcast %c2_i32_11 : i32 to vector<8x128xi32>
    %42 = arith.cmpi eq, %1, %41 : vector<8x128xi32>
    %43 = arith.select %42, %40, %30 : vector<8x128xi1>, vector<8x128xf32>
    %44 = arith.addi %0, %3 : i32
    %c3_i32 = arith.constant 3 : i32
    %45 = arith.addi %44, %c3_i32 : i32
    %46 = arith.index_cast %45 : i32 to index
    %47 = memref.load %arg1[%46] : memref<16xi32, #tpu.memory_space<smem>>
    %c0_i32_12 = arith.constant 0 : i32
    %c63_i32_13 = arith.constant 63 : i32
    %48 = arith.maxsi %c0_i32_12, %47 : i32
    %49 = arith.minsi %c63_i32_13, %48 : i32
    %50 = arith.index_cast %49 : i32 to index
    %c0_14 = arith.constant 0 : index
    %51 = vector.load %arg2[%50, %c0_14] : memref<64x128xf32, #tpu.memory_space<vmem>>, vector<1x128xf32>
    %52 = vector.shape_cast %51 : vector<1x128xf32> to vector<1x128xf32>
    %53 = vector.broadcast %52 : vector<1x128xf32> to vector<8x128xf32>
    %c3_i32_15 = arith.constant 3 : i32
    %54 = vector.broadcast %c3_i32_15 : i32 to vector<8x128xi32>
    %55 = arith.cmpi eq, %1, %54 : vector<8x128xi32>
    %56 = arith.select %55, %53, %43 : vector<8x128xi1>, vector<8x128xf32>
    %57 = arith.addi %0, %3 : i32
    %c4_i32 = arith.constant 4 : i32
    %58 = arith.addi %57, %c4_i32 : i32
    %59 = arith.index_cast %58 : i32 to index
    %60 = memref.load %arg1[%59] : memref<16xi32, #tpu.memory_space<smem>>
    %c0_i32_16 = arith.constant 0 : i32
    %c63_i32_17 = arith.constant 63 : i32
    %61 = arith.maxsi %c0_i32_16, %60 : i32
    %62 = arith.minsi %c63_i32_17, %61 : i32
    %63 = arith.index_cast %62 : i32 to index
    %c0_18 = arith.constant 0 : index
    %64 = vector.load %arg2[%63, %c0_18] : memref<64x128xf32, #tpu.memory_space<vmem>>, vector<1x128xf32>
    %65 = vector.shape_cast %64 : vector<1x128xf32> to vector<1x128xf32>
    %66 = vector.broadcast %65 : vector<1x128xf32> to vector<8x128xf32>
    %c4_i32_19 = arith.constant 4 : i32
    %67 = vector.broadcast %c4_i32_19 : i32 to vector<8x128xi32>
    %68 = arith.cmpi eq, %1, %67 : vector<8x128xi32>
    %69 = arith.select %68, %66, %56 : vector<8x128xi1>, vector<8x128xf32>
    %70 = arith.addi %0, %3 : i32
    %c5_i32 = arith.constant 5 : i32
    %71 = arith.addi %70, %c5_i32 : i32
    %72 = arith.index_cast %71 : i32 to index
    %73 = memref.load %arg1[%72] : memref<16xi32, #tpu.memory_space<smem>>
    %c0_i32_20 = arith.constant 0 : i32
    %c63_i32_21 = arith.constant 63 : i32
    %74 = arith.maxsi %c0_i32_20, %73 : i32
    %75 = arith.minsi %c63_i32_21, %74 : i32
    %76 = arith.index_cast %75 : i32 to index
    %c0_22 = arith.constant 0 : index
    %77 = vector.load %arg2[%76, %c0_22] : memref<64x128xf32, #tpu.memory_space<vmem>>, vector<1x128xf32>
    %78 = vector.shape_cast %77 : vector<1x128xf32> to vector<1x128xf32>
    %79 = vector.broadcast %78 : vector<1x128xf32> to vector<8x128xf32>
    %c5_i32_23 = arith.constant 5 : i32
    %80 = vector.broadcast %c5_i32_23 : i32 to vector<8x128xi32>
    %81 = arith.cmpi eq, %1, %80 : vector<8x128xi32>
    %82 = arith.select %81, %79, %69 : vector<8x128xi1>, vector<8x128xf32>
    %83 = arith.addi %0, %3 : i32
    %c6_i32 = arith.constant 6 : i32
    %84 = arith.addi %83, %c6_i32 : i32
    %85 = arith.index_cast %84 : i32 to index
    %86 = memref.load %arg1[%85] : memref<16xi32, #tpu.memory_space<smem>>
    %c0_i32_24 = arith.constant 0 : i32
    %c63_i32_25 = arith.constant 63 : i32
    %87 = arith.maxsi %c0_i32_24, %86 : i32
    %88 = arith.minsi %c63_i32_25, %87 : i32
    %89 = arith.index_cast %88 : i32 to index
    %c0_26 = arith.constant 0 : index
    %90 = vector.load %arg2[%89, %c0_26] : memref<64x128xf32, #tpu.memory_space<vmem>>, vector<1x128xf32>
    %91 = vector.shape_cast %90 : vector<1x128xf32> to vector<1x128xf32>
    %92 = vector.broadcast %91 : vector<1x128xf32> to vector<8x128xf32>
    %c6_i32_27 = arith.constant 6 : i32
    %93 = vector.broadcast %c6_i32_27 : i32 to vector<8x128xi32>
    %94 = arith.cmpi eq, %1, %93 : vector<8x128xi32>
    %95 = arith.select %94, %92, %82 : vector<8x128xi1>, vector<8x128xf32>
    %96 = arith.addi %0, %3 : i32
    %c7_i32 = arith.constant 7 : i32
    %97 = arith.addi %96, %c7_i32 : i32
    %98 = arith.index_cast %97 : i32 to index
    %99 = memref.load %arg1[%98] : memref<16xi32, #tpu.memory_space<smem>>
    %c0_i32_28 = arith.constant 0 : i32
    %c63_i32_29 = arith.constant 63 : i32
    %100 = arith.maxsi %c0_i32_28, %99 : i32
    %101 = arith.minsi %c63_i32_29, %100 : i32
    %102 = arith.index_cast %101 : i32 to index
    %c0_30 = arith.constant 0 : index
    %103 = vector.load %arg2[%102, %c0_30] : memref<64x128xf32, #tpu.memory_space<vmem>>, vector<1x128xf32>
    %104 = vector.shape_cast %103 : vector<1x128xf32> to vector<1x128xf32>
    %105 = vector.broadcast %104 : vector<1x128xf32> to vector<8x128xf32>
    %c7_i32_31 = arith.constant 7 : i32
    %106 = vector.broadcast %c7_i32_31 : i32 to vector<8x128xi32>
    %107 = arith.cmpi eq, %1, %106 : vector<8x128xi32>
    %108 = arith.select %107, %105, %95 : vector<8x128xi1>, vector<8x128xf32>
    %109 = arith.index_cast %3 : i32 to index
    %c0_32 = arith.constant 0 : index
    %110 = vector.load %arg3[%109, %c0_32] : memref<8x128xf32, #tpu.memory_space<vmem>>, vector<8x128xf32>
    %111 = arith.addf %108, %110 : vector<8x128xf32>
    %112 = arith.index_cast %3 : i32 to index
    %c0_33 = arith.constant 0 : index
    %113 = vector.load %arg4[%112, %c0_33] : memref<8x128xf32, #tpu.memory_space<vmem>>, vector<8x128xf32>
    tpu.vector_store %arg4[%112, %c0_33], %111 {strides = array<i32>} : memref<8x128xf32, #tpu.memory_space<vmem>>, vector<8x128xf32>,
    %c1_i32_34 = arith.constant 1 : i32
    return
  }
  func.func @transform_0(%arg0: i32, %arg1: memref<16xi32, #tpu.memory_space<smem>>) -> (i32, i32) {
    %c0_i32 = arith.constant 0 : i32
    %c0_i32_0 = arith.constant 0 : i32
    %c0_i32_1 = arith.constant 0 : i32
    return %c0_i32, %c0_i32_0 : i32, i32
  }
  func.func @transform_1(%arg0: i32, %arg1: memref<16xi32, #tpu.memory_space<smem>>) -> (i32, i32) {
    %c1_i32 = arith.constant 1 : i32
    %c0_i32 = arith.constant 0 : i32
    %0 = arith.cmpi eq, %c1_i32, %c0_i32 : i32
    %c1_i32_0 = arith.constant 1 : i32
    %1 = arith.select %0, %c1_i32_0, %c1_i32 : i32
    %2 = arith.remsi %arg0, %1 : i32
    %c0_i32_1 = arith.constant 0 : i32
    %3 = arith.cmpi ne, %2, %c0_i32_1 : i32
    %c0_i32_2 = arith.constant 0 : i32
    %4 = arith.cmpi slt, %2, %c0_i32_2 : i32
    %c0_i32_3 = arith.constant 0 : i32
    %5 = arith.cmpi slt, %1, %c0_i32_3 : i32
    %6 = arith.xori %4, %5 : i1
    %7 = arith.andi %6, %3 : i1
    %8 = arith.addi %2, %1 : i32
    %9 = arith.select %7, %8, %2 : i32
    %c0_i32_4 = arith.constant 0 : i32
    %c0_i32_5 = arith.constant 0 : i32
    return %9, %c0_i32_4 : i32, i32
  }
  func.func @transform_2(%arg0: i32, %arg1: memref<16xi32, #tpu.memory_space<smem>>) -> (i32, i32) {
    %c0_i32 = arith.constant 0 : i32
    %c0_i32_0 = arith.constant 0 : i32
    return %arg0, %c0_i32 : i32, i32
  }
}

</mosaic_0001>

<llo_original>
// kernel: tpu_custom_call.1
$region0: #{tpu_custom_call.1}
  #allocation0 [shape = 'u32[]', space=smem, size = 0x4, offset = 0x4, fixed_abs, tag = 'smem constant byte address 0x4 - core index']
  #allocation1 [shape = 'u32[144,128]{1,0:T(1,128)}', space=vmem, size = 0x12000, scoped, tag = 'internal scratch']
  #allocation2 [shape = 's32[1]{0}', space=sflag, size = 0x4, scoped, tag = 'scoped memory for tpu_custom_call.1']
  #allocation3 [shape = 'u8[512]{0}', space=smem, size = 0x200, scoped, tag = 'prefetched SMEM operand 0']
  %s0 = inlined_call_operand.hbm [shape: s32[16], index: 0, kind: input, shape index: {}]
  %s1 = inlined_call_operand.hbm [shape: f32[64,128], index: 1, kind: input, shape index: {}]
  %s2 = inlined_call_operand.hbm [shape: f32[8,128], index: 2, kind: input, shape index: {}]
  %s3 = inlined_call_operand.hbm [shape: f32[16,128], index: 3, kind: output, shape index: {}]
  %s4 = sld [smem:[#allocation0]]
  $region49: #{tpu_custom_call.1} parent=0
    _
  %s6 = ssub.s32 1, %s4
  %s7 = scalar_select 0, %s6, %s4
  %9 = dma.hbm_to_smem %s0, 16, [#allocation3], [#allocation2]
  %10 = dma.done [#allocation2], 16
  %11 = sfence
  $region1: #{tpu_custom_call.1} parent=0
    #allocation4 [shape = 'u8[32768]{0}', space=vmem, size = 0x8000, scoped, tag = 'input window, operand 1, single buffered']
    #allocation5 [shape = 's32[2]{0}', space=sflag, size = 0x8, scoped, tag = 'scoped memory for tpu_custom_call.1']
    #allocation6 [shape = 's32[2]{0}', space=sflag, size = 0x8, scoped, tag = 'scoped memory for tpu_custom_call.1']
    #allocation7 [shape = 'u8[4096]{0}', space=vmem, size = 0x1000, scoped, tag = 'input window, operand 2, single buffered']
    #allocation8 [shape = 's32[1]{0}', space=sflag, size = 0x4, scoped, tag = 'scoped memory for tpu_custom_call.1']
    #allocation9 [shape = 'u8[8192]{0}', space=vmem, size = 0x2000, scoped, tag = 'output window, operand 0']
    %12 = vsyncpa [#allocation5], 0
    %13 = vsyncpa [#allocation8], 0
    %14 = vsyncpa [#allocation6], 0
    %s15 = scalar_lea.sflag [#allocation6], 1
    %16 = vsyncpa %s15, 0
    loop: start=0, step=1, limit=4
    $region2: #{tpu_custom_call.1} parent=1 // loop_pre_header
      _
    $region3: #{tpu_custom_call.1} parent=1 // loop_header
      %s18 = sphi 0, %s22
      %p19 = scmp.ge.s32.totalorder %s18, 4
      %s26 = sphi 0, %s26
      %s28 = sphi 0, %s26
      %s29 = sphi 0, %s28
      %s43 = sphi 0, %s29
      %s47 = sphi 0, %s47
      %s49 = sphi 0, %s47
      %s50 = sphi 0, %s49
      %s64 = sphi 0, %s50
      %s70 = sphi 0, %s72
      %s73 = sphi 0, %s70
      %s74 = sphi 0, %s73
      %s90 = sphi 0, %s74
    $region4: #{tpu_custom_call.1} parent=1 // loop_header_branch
      %21 = sbr.rel (%p19) target = $region8
    $region5: #{tpu_custom_call.1} parent=1 // loop_body
      %s23 = ssub.s32 %s18, 1
      %s24 = ssub.s32 %s18, 2
      %s25 = sadd.s32 %s18, 1
      %s27 = sadd.s32 %s26, 1
      %p30 = scmp.eq.s32.totalorder %s18, 1
      %p31 = scmp.ne.s32.totalorder %s26, %s28
      %p32 = scmp.eq.s32.totalorder %s18, 0
      %p33 = por %p31, %p32
      %p34 = scmp.ne.s32.totalorder %s26, %s28
      %p35 = scmp.eq.s32.totalorder %s23, 1
      %p36 = por %p34, %p35
      %p37 = scmp.ne.s32.totalorder %s28, %s29
      %p38 = scmp.eq.s32.totalorder %s23, 0
      %p39 = por %p37, %p38
      %p40 = scmp.ne.s32.totalorder %s28, %s29
      %p41 = scmp.eq.s32.totalorder %s24, 1
      %p42 = por %p40, %p41
      %p44 = scmp.ne.s32.totalorder %s29, %s43
      %p45 = scmp.eq.s32.totalorder %s24, 0
      %p46 = por %p44, %p45
      %s48 = sadd.s32 %s47, 1
      %p51 = scmp.eq.s32.totalorder %s18, 1
      %p52 = scmp.ne.s32.totalorder %s47, %s49
      %p53 = scmp.eq.s32.totalorder %s18, 0
      %p54 = por %p52, %p53
      %p55 = scmp.ne.s32.totalorder %s47, %s49
      %p56 = scmp.eq.s32.totalorder %s23, 1
      %p57 = por %p55, %p56
      %p58 = scmp.ne.s32.totalorder %s49, %s50
      %p59 = scmp.eq.s32.totalorder %s23, 0
      %p60 = por %p58, %p59
      %p61 = scmp.ne.s32.totalorder %s49, %s50
      %p62 = scmp.eq.s32.totalorder %s24, 1
      %p63 = por %p61, %p62
      %p65 = scmp.ne.s32.totalorder %s50, %s64
      %p66 = scmp.eq.s32.totalorder %s24, 0
      %p67 = por %p65, %p66
      %s68 = ssub.s32 %s18, %s25
      %p69 = scmp.eq.s32.totalorder %s68, 0
      %s71 = sadd.s32 %s70, 1
      %s72 = scalar_select %p69, %s70, %s71
      %p75 = pneg %p69
      %p76 = scmp.eq.s32.totalorder %s18, 1
      %p77 = por %p75, %p76
      %p78 = scmp.ne.s32.totalorder %s70, %s73
      %p79 = scmp.eq.s32.totalorder %s18, 0
      %p80 = por %p78, %p79
      %p81 = scmp.ne.s32.totalorder %s70, %s73
      %p82 = scmp.eq.s32.totalorder %s23, 1
      %p83 = por %p81, %p82
      %p84 = scmp.ne.s32.totalorder %s73, %s74
      %p85 = scmp.eq.s32.totalorder %s23, 0
      %p86 = por %p84, %p85
      %p87 = scmp.ne.s32.totalorder %s73, %s74
      %p88 = scmp.eq.s32.totalorder %s24, 1
      %p89 = por %p87, %p88
      %p91 = scmp.ne.s32.totalorder %s74, %s90
      %p92 = scmp.eq.s32.totalorder %s24, 0
      %p93 = por %p91, %p92
      %p94 = scmp.le.s32.totalorder 1, %s18
      %p95 = scmp.lt.s32.totalorder %s18, 3
      %p96 = pnand %p94, %p95
      %p97 = pneg %p96
      // Predicated region
      $region9: #{tpu_custom_call.1} parent=5 // pred_check
        _
      $region10: #{tpu_custom_call.1} parent=5 // pred_check_branch
        %99 = sbr.rel (%p96) target = $region12
      $region11: #{tpu_custom_call.1} parent=5 // pred_region
        %s100 = ssub.s32 %s18, 1
        // Predicated region
        $region13: #{tpu_custom_call.1} parent=11 // pred_check
          %p101 = pneg %p39
        $region14: #{tpu_custom_call.1} parent=11 // pred_check_branch
          %103 = sbr.rel (%p101) target = $region16
        $region15: #{tpu_custom_call.1} parent=11 // pred_region
          %s105 = ssub.s32 1024, 1024
          %106 = vsyncadd [#allocation5], %s105
          %s107 = sshll.u32 [#allocation4], 4
          %s108 = int_to_ptr.vmem [resolvable:$true] %s107
          %113 = dma.hbm_to_vmem [thread:$0]  %s1, 1024, %s108, [#allocation5], 128, 128, 8
        $region16: #{tpu_custom_call.1} parent=11 // pred_fallthru
          _
        // Predicated region
        $region17: #{tpu_custom_call.1} parent=11 // pred_check
          %p114 = pneg %p60
        $region18: #{tpu_custom_call.1} parent=11 // pred_check_branch
          %116 = sbr.rel (%p114) target = $region20
        $region19: #{tpu_custom_call.1} parent=11 // pred_region
          %s118 = ssub.s32 128, 128
          %119 = vsyncadd [#allocation8], %s118
          %s121 = sshll.u32 [#allocation7], 4
          %s122 = int_to_ptr.vmem [resolvable:$true] %s121
          %124 = dma.hbm_to_vmem [thread:$0]  %s2, 128, %s122, [#allocation8]
        $region20: #{tpu_custom_call.1} parent=11 // pred_fallthru
          _
      $region12: #{tpu_custom_call.1} parent=5 // pred_fallthru
        _
      %p125 = scmp.lt.s32.totalorder %s18, 2
      // Predicated region
      $region21: #{tpu_custom_call.1} parent=5 // pred_check
        %p126 = pneg %p125
      $region22: #{tpu_custom_call.1} parent=5 // pred_check_branch
        %128 = sbr.rel (%p126) target = $region24
      $region23: #{tpu_custom_call.1} parent=5 // pred_region
        _
      $region24: #{tpu_custom_call.1} parent=5 // pred_fallthru
        _
      %p129 = scmp.le.s32.totalorder 1, %s18
      %p130 = scmp.lt.s32.totalorder %s18, 3
      %p131 = pnand %p129, %p130
      %p132 = pneg %p131
      // Predicated region
      $region25: #{tpu_custom_call.1} parent=5 // pred_check
        _
      $region26: #{tpu_custom_call.1} parent=5 // pred_check_branch
        %134 = sbr.rel (%p131) target = $region28
      $region27: #{tpu_custom_call.1} parent=5 // pred_region
        %s135 = ssub.s32 %s18, 1
        // Predicated region
        $region29: #{tpu_custom_call.1} parent=27 // pred_check
          %p136 = pneg %p39
        $region30: #{tpu_custom_call.1} parent=27 // pred_check_branch
          %138 = sbr.rel (%p136) target = $region32
        $region31: #{tpu_custom_call.1} parent=27 // pred_region
          %139 = dma.done [#allocation5], 1024
        $region32: #{tpu_custom_call.1} parent=27 // pred_fallthru
          _
        // Predicated region
        $region33: #{tpu_custom_call.1} parent=27 // pred_check
          %p140 = pneg %p60
        $region34: #{tpu_custom_call.1} parent=27 // pred_check_branch
          %142 = sbr.rel (%p140) target = $region36
        $region35: #{tpu_custom_call.1} parent=27 // pred_region
          %143 = dma.done [#allocation8], 128
        $region36: #{tpu_custom_call.1} parent=27 // pred_fallthru
          _
        %p144 = pneg %p39
        %p145 = pneg %p36
        %p146 = pneg %p60
        %p147 = pneg %p57
        %p148 = pneg %p86
        %p149 = pneg %p83
        %s150 = sand.u32 %s73, 1
        %s151 = scalar_lea.sflag [#allocation6], %s150
        %s152 = sand.u32 %s73, 1
        %s153 = smul.addr %s152, 8
        %s154 = scalar_lea.vmem [#allocation9], %s153
        %s155 = smul.u32 %s23, 8
        %v156 = vlaneseq
        %v157 = vshrl.u32 %v156, 7
        %s158 = sadd.s32 %s155, 0
        %s159 = sld [smem:[#allocation3 + %s158]]
        %p160 = scmp.gt.s32.totalorder %s159, 0
        %s161 = scalar_select %p160, %s159, 0
        %p162 = scmp.lt.s32.totalorder %s161, 63
        %s163 = scalar_select %p162, %s161, 63
        %s164 = scalar_lea.vmem [#allocation4], %s163
        %v165 = vld [vmem:[%s164] sm:$0x1]
        %v166 = vlaneseq
        %v167 = vshrl.u32 %v166, 7
        %v168 = vsub.s32 0, %v167
        %v169 = vrot.slane %v165, %v168
        %vm170 = vcmp.eq.s32.totalorder %v157, 0
        %v171 = vsel %vm170, %v169, 0.0
        %s172 = sadd.s32 %s158, 1
        %s173 = sld [smem:[#allocation3 + %s172]]
        %p174 = scmp.gt.s32.totalorder %s173, 0
        %s175 = scalar_select %p174, %s173, 0
        %p176 = scmp.lt.s32.totalorder %s175, 63
        %s177 = scalar_select %p176, %s175, 63
        %s178 = scalar_lea.vmem [#allocation4], %s177
        %v179 = vld [vmem:[%s178] sm:$0x1]
        %v180 = vlaneseq
        %v181 = vshrl.u32 %v180, 7
        %v182 = vsub.s32 0, %v181
        %v183 = vrot.slane %v179, %v182
        %vm184 = vcmp.eq.s32.totalorder %v157, 1
        %v185 = vsel %vm184, %v183, %v171
        %s186 = sadd.s32 %s158, 2
        %s187 = sld [smem:[#allocation3 + %s186]]
        %p188 = scmp.gt.s32.totalorder %s187, 0
        %s189 = scalar_select %p188, %s187, 0
        %p190 = scmp.lt.s32.totalorder %s189, 63
        %s191 = scalar_select %p190, %s189, 63
        %s192 = scalar_lea.vmem [#allocation4], %s191
        %v193 = vld [vmem:[%s192] sm:$0x1]
        %v194 = vlaneseq
        %v195 = vshrl.u32 %v194, 7
        %v196 = vsub.s32 0, %v195
        %v197 = vrot.slane %v193, %v196
        %vm198 = vcmp.eq.s32.totalorder %v157, 2
        %v199 = vsel %vm198, %v197, %v185
        %s200 = sadd.s32 %s158, 3
        %s201 = sld [smem:[#allocation3 + %s200]]
        %p202 = scmp.gt.s32.totalorder %s201, 0
        %s203 = scalar_select %p202, %s201, 0
        %p204 = scmp.lt.s32.totalorder %s203, 63
        %s205 = scalar_select %p204, %s203, 63
        %s206 = scalar_lea.vmem [#allocation4], %s205
        %v207 = vld [vmem:[%s206] sm:$0x1]
        %v208 = vlaneseq
        %v209 = vshrl.u32 %v208, 7
        %v210 = vsub.s32 0, %v209
        %v211 = vrot.slane %v207, %v210
        %vm212 = vcmp.eq.s32.totalorder %v157, 3
        %v213 = vsel %vm212, %v211, %v199
        %s214 = sadd.s32 %s158, 4
        %s215 = sld [smem:[#allocation3 + %s214]]
        %p216 = scmp.gt.s32.totalorder %s215, 0
        %s217 = scalar_select %p216, %s215, 0
        %p218 = scmp.lt.s32.totalorder %s217, 63
        %s219 = scalar_select %p218, %s217, 63
        %s220 = scalar_lea.vmem [#allocation4], %s219
        %v221 = vld [vmem:[%s220] sm:$0x1]
        %v222 = vlaneseq
        %v223 = vshrl.u32 %v222, 7
        %v224 = vsub.s32 0, %v223
        %v225 = vrot.slane %v221, %v224
        %vm226 = vcmp.eq.s32.totalorder %v157, 4
        %v227 = vsel %vm226, %v225, %v213
        %s228 = sadd.s32 %s158, 5
        %s229 = sld [smem:[#allocation3 + %s228]]
        %p230 = scmp.gt.s32.totalorder %s229, 0
        %s231 = scalar_select %p230, %s229, 0
        %p232 = scmp.lt.s32.totalorder %s231, 63
        %s233 = scalar_select %p232, %s231, 63
        %s234 = scalar_lea.vmem [#allocation4], %s233
        %v235 = vld [vmem:[%s234] sm:$0x1]
        %v236 = vlaneseq
        %v237 = vshrl.u32 %v236, 7
        %v238 = vsub.s32 0, %v237
        %v239 = vrot.slane %v235, %v238
        %vm240 = vcmp.eq.s32.totalorder %v157, 5
        %v241 = vsel %vm240, %v239, %v227
        %s242 = sadd.s32 %s158, 6
        %s243 = sld [smem:[#allocation3 + %s242]]
        %p244 = scmp.gt.s32.totalorder %s243, 0
        %s245 = scalar_select %p244, %s243, 0
        %p246 = scmp.lt.s32.totalorder %s245, 63
        %s247 = scalar_select %p246, %s245, 63
        %s248 = scalar_lea.vmem [#allocation4], %s247
        %v249 = vld [vmem:[%s248] sm:$0x1]
        %v250 = vlaneseq
        %v251 = vshrl.u32 %v250, 7
        %v252 = vsub.s32 0, %v251
        %v253 = vrot.slane %v249, %v252
        %vm254 = vcmp.eq.s32.totalorder %v157, 6
        %v255 = vsel %vm254, %v253, %v241
        %s256 = sadd.s32 %s158, 7
        %s257 = sld [smem:[#allocation3 + %s256]]
        %p258 = scmp.gt.s32.totalorder %s257, 0
        %s259 = scalar_select %p258, %s257, 0
        %p260 = scmp.lt.s32.totalorder %s259, 63
        %s261 = scalar_select %p260, %s259, 63
        %s262 = scalar_lea.vmem [#allocation4], %s261
        %v263 = vld [vmem:[%s262] sm:$0x1]
        %v264 = vlaneseq
        %v265 = vshrl.u32 %v264, 7
        %v266 = vsub.s32 0, %v265
        %v267 = vrot.slane %v263, %v266
        %vm268 = vcmp.eq.s32.totalorder %v157, 7
        %v269 = vsel %vm268, %v267, %v255
        %v270 = vld [vmem:[#allocation7] sm:$0xff]
        %v271 = vadd.f32 %v269, %v270
        %272 = vst [vmem:[%s154] sm:$0xff] %v271
        %s273 = sand.u32 %s73, 1
        %s274 = scalar_lea.sflag [#allocation6], %s273
        %s275 = sand.u32 %s73, 1
        %s276 = smul.addr %s275, 8
        %s277 = scalar_lea.vmem [#allocation9], %s276
        // Predicated region
        $region37: #{tpu_custom_call.1} parent=27 // pred_check
          %p278 = pneg %p83
        $region38: #{tpu_custom_call.1} parent=27 // pred_check_branch
          %280 = sbr.rel (%p278) target = $region40
        $region39: #{tpu_custom_call.1} parent=27 // pred_region
          %s282 = ssub.s32 128, 128
          %283 = vsyncadd %s274, %s282
          %s284 = smul.addr %s23, 128
          %s285 = scalar_lea.hbm %s3, %s284
          %s287 = sshll.u32 %s277, 4
          %s288 = int_to_ptr.vmem [resolvable:$true] %s287
          %290 = dma.vmem_to_hbm [thread:$0]  %s288, 128, %s285, %s274
        $region40: #{tpu_custom_call.1} parent=27 // pred_fallthru
          _
      $region28: #{tpu_custom_call.1} parent=5 // pred_fallthru
        _
      %p291 = scmp.le.s32.totalorder 2, %s18
      // Predicated region
      $region41: #{tpu_custom_call.1} parent=5 // pred_check
        %p292 = pneg %p291
      $region42: #{tpu_custom_call.1} parent=5 // pred_check_branch
        %294 = sbr.rel (%p292) target = $region44
      $region43: #{tpu_custom_call.1} parent=5 // pred_region
        %s295 = ssub.s32 %s18, 2
        // Predicated region
        $region45: #{tpu_custom_call.1} parent=43 // pred_check
          %p296 = pneg %p89
        $region46: #{tpu_custom_call.1} parent=43 // pred_check_branch
          %298 = sbr.rel (%p296) target = $region48
        $region47: #{tpu_custom_call.1} parent=43 // pred_region
          %s299 = sand.u32 %s74, 1
          %s300 = scalar_lea.sflag [#allocation6], %s299
          %s301 = sand.u32 %s74, 1
          %s302 = smul.addr %s301, 8
          %s303 = scalar_lea.vmem [#allocation9], %s302
          %304 = dma.done %s300, 128
        $region48: #{tpu_custom_call.1} parent=43 // pred_fallthru
          _
      $region44: #{tpu_custom_call.1} parent=5 // pred_fallthru
        _
    $region6: #{tpu_custom_call.1} parent=1 // loop_footer
      %s22 = sadd.s32 1, %s18
    $region7: #{tpu_custom_call.1} parent=1 // loop_footer_branch
      %17 = sbr.rel target = $region3
    $region8: #{tpu_custom_call.1} parent=1 // loop_exit
      _
    %305 = vsyncpa [#allocation5], 1
    %s306 = scalar_lea.sflag [#allocation5], 1
    %307 = vsyncpa %s306, 1
    %308 = vsyncpa [#allocation8], 1
    %309 = vsyncpa [#allocation6], 1
    %s310 = scalar_lea.sflag [#allocation6], 1
    %311 = vsyncpa %s310, 1

</llo_original>
